<compile_context>
chip_gen: v7x
topology: tpu7x:2x2x1
jax: 0.10.0
libtpu: 0.0.40
codegen_flags: <defaults>
</compile_context>

<pallas_src>
import numpy as np
import jax
import jax.numpy as jnp
from jax.experimental import pallas as pl
from jax.experimental.pallas import tpu as pltpu


def spatial_discounting_mask(mask_width, mask_height, discounting_gamma, discounting=1):
    """NumPy port of the reference mask generator. Returns (1, 1, mw, mh) float32."""
    gamma = discounting_gamma
    if discounting:
        mask_values = np.ones((mask_width, mask_height), dtype="float32")
        for i in range(mask_width):
            for j in range(mask_height):
                mask_values[i, j] = max(
                    gamma ** min(i, mask_width - i),
                    gamma ** min(j, mask_height - j),
                )
        mask_values = mask_values[None, None, :, :]
    else:
        mask_values = np.ones((1, 1, mask_width, mask_height), dtype="float32")
    return mask_values


def _round_up(x, m):
    return (x + m - 1) // m * m


def _discounted_l1_kernel(x_ref, y_ref, m_ref, sum_ref, acc_ref):
    # x_ref, y_ref: (TILE_ROWS, Lp) lane-dense tile for the current row-chunk
    # m_ref:        (1, Lp) discounting mask (same block every grid step)
    # sum_ref:      (1,) SMEM scalar output, written once on the last step
    # acc_ref:      (TILE_ROWS, Lp) f32 VMEM accumulator (persists across steps)
    step = pl.program_id(0)

    @pl.when(step == 0)
    def _():
        acc_ref[...] = jnp.zeros_like(acc_ref)
        sum_ref[0] = jnp.float32(0.0)

    x = x_ref[...].astype(jnp.float32)
    y = y_ref[...].astype(jnp.float32)
    m = m_ref[...]                                  # (1, Lp) broadcasts over rows
    # mask is non-negative, so |x*m - y*m| == |x - y| * m  (one fewer multiply)
    acc_ref[...] += jnp.abs(x - y) * m              # pure VPU add, no per-step reduce

    @pl.when(step == pl.num_programs(0) - 1)
    def _():
        sum_ref[0] = jnp.sum(acc_ref[...])          # single XLU reduce at the end


def discounted_l1(inp, target, mask, *, target_tile_bytes=1 << 20):
    """inp, target: (N, C, H, W); mask: (..., H, W). Returns scalar mean L1."""
    assert inp.shape == target.shape
    N, C, H, W = inp.shape
    # PyTorch broadcasts the registered (1,1,mw,mh) buffer against (N,C,H,W),
    # so its spatial dims must equal (H, W) exactly; enforce the same here.
    assert mask.shape[-2:] == (H, W), "discounting mask spatial size must equal input (H, W)"

    R, L = N * C, H * W
    x2 = inp.reshape(R, L)                  # keep original dtype (bf16 stays bf16 in HBM)
    y2 = target.reshape(R, L)
    m2 = mask.reshape(1, L).astype(jnp.float32)

    # Lane-dense padding: last dim to a multiple of 128, rows to a multiple of 8,
    # then to a multiple of the tile so every grid step is a full block.
    Lp = _round_up(L, 128)
    bytes_per_row = Lp * 4
    tile_rows = max(8, (target_tile_bytes // bytes_per_row) // 8 * 8)
    R8 = _round_up(R, 8)
    tile_rows = min(tile_rows, R8)
    Rp = _round_up(R8, tile_rows)

    if (Rp, Lp) != (R, L):
        x2 = jnp.pad(x2, ((0, Rp - R), (0, Lp - L)))   # zero padding is sum-neutral
        y2 = jnp.pad(y2, ((0, Rp - R), (0, Lp - L)))
        m2 = jnp.pad(m2, ((0, 0), (0, Lp - L)))

    num_chunks = Rp // tile_rows

    total = pl.pallas_call(
        _discounted_l1_kernel,
        out_shape=jax.ShapeDtypeStruct((1,), jnp.float32),
        grid_spec=pltpu.PrefetchScalarGridSpec(
            num_scalar_prefetch=0,
            grid=(num_chunks,),
            in_specs=[
                pl.BlockSpec((tile_rows, Lp), lambda i: (i, 0)),
                pl.BlockSpec((tile_rows, Lp), lambda i: (i, 0)),
                pl.BlockSpec((1, Lp), lambda i: (0, 0)),
            ],
            out_specs=pl.BlockSpec(memory_space=pltpu.SMEM),
            scratch_shapes=[pltpu.VMEM((tile_rows, Lp), jnp.float32)],
        ),
        compiler_params=pltpu.CompilerParams(
            dimension_semantics=("arbitrary",),   # accumulator carried across the grid
        ),
    )(x2, y2, m2)

    # Mean over the ORIGINAL element count (padding contributed exactly zero).
    return total[0] / jnp.float32(N * C * H * W)


if __name__ == "__main__":
    # opt.fineSize=32, opt.overlap=0, opt.discounting=1  ->  mask is 16x16
    fineSize, overlap, discounting = 32, 0, 1
    mw = fineSize // 2 - overlap * 2  # 16
    mask_np = spatial_discounting_mask(mw, mw, 0.9, discounting)
    mask = jnp.asarray(mask_np)  # (1, 1, 16, 16)

    key = jax.random.PRNGKey(0)
    k1, k2 = jax.random.split(key)
    N, C, H, W = 2, 4, mw, mw
    x = jax.random.normal(k1, (N, C, H, W), dtype=jnp.float32)
    y = jax.random.normal(k2, (N, C, H, W), dtype=jnp.float32)

    loss = discounted_l1(x, y, mask)
    loss = jax.block_until_ready(loss)

    # Reference check (pure JAX, same semantics as torch.nn.L1Loss mean reduction)
    ref = jnp.mean(jnp.abs(x * mask - y * mask))
    assert jnp.allclose(loss, ref, rtol=1e-5, atol=1e-6), (loss, ref)

    print("KERNEL_OK")
</pallas_src>

<mosaic_0001>
module attributes {stable_mosaic.version = 11 : i64} {
  func.func @_discounted_l1_kernel(%arg0: i32, %arg1: memref<8x256xf32, #tpu.memory_space<vmem>>, %arg2: memref<8x256xf32, #tpu.memory_space<vmem>>, %arg3: memref<1x256xf32, #tpu.memory_space<vmem>>, %arg4: memref<1xf32, #tpu.memory_space<smem>>, %arg5: memref<8x256xf32, #tpu.memory_space<vmem>>) attributes {dimension_semantics = [#tpu.dimension_semantics<arbitrary>], iteration_bounds = array<i64: 1>, scalar_prefetch = 0 : i64, scratch_operands = 1 : i64, tpu.core_type = #tpu.core_type<tc>, window_params = [{transform_indices = @transform_0, window_bounds = array<i64: 8, 256>}, {transform_indices = @transform_1, window_bounds = array<i64: 8, 256>}, {pipeline_mode = #tpu.pipeline_mode<synchronous>, transform_indices = @transform_2, window_bounds = array<i64: 1, 256>}, {transform_indices = @transform_3, window_bounds = array<i64: 1>}]} {
    %c0_i32 = arith.constant 0 : i32
    %0 = arith.cmpi eq, %arg0, %c0_i32 : i32
    %1 = arith.extui %0 : i1 to i32
    %c0_i32_0 = arith.constant 0 : i32
    %2 = arith.cmpi ne, %1, %c0_i32_0 : i32
    scf.if %2 {
      %cst = arith.constant 0.000000e+00 : f32
      %16 = vector.broadcast %cst : f32 to vector<8x256xf32>
      %c0_12 = arith.constant 0 : index
      %c0_13 = arith.constant 0 : index
      %17 = vector.load %arg5[%c0_12, %c0_13] : memref<8x256xf32, #tpu.memory_space<vmem>>, vector<8x256xf32>
      tpu.vector_store %arg5[%c0_12, %c0_13], %16 {strides = array<i32>} : memref<8x256xf32, #tpu.memory_space<vmem>>, vector<8x256xf32>,
      %cst_14 = arith.constant 0.000000e+00 : f32
      %c0_15 = arith.constant 0 : index
      %18 = memref.load %arg4[%c0_15] : memref<1xf32, #tpu.memory_space<smem>>
      memref.store %cst_14, %arg4[%c0_15] : memref<1xf32, #tpu.memory_space<smem>>
    } else {
    }
    %c0 = arith.constant 0 : index
    %c0_1 = arith.constant 0 : index
    %3 = vector.load %arg1[%c0, %c0_1] : memref<8x256xf32, #tpu.memory_space<vmem>>, vector<8x256xf32>
    %c0_2 = arith.constant 0 : index
    %c0_3 = arith.constant 0 : index
    %4 = vector.load %arg2[%c0_2, %c0_3] : memref<8x256xf32, #tpu.memory_space<vmem>>, vector<8x256xf32>
    %c0_4 = arith.constant 0 : index
    %c0_5 = arith.constant 0 : index
    %5 = vector.load %arg3[%c0_4, %c0_5] : memref<1x256xf32, #tpu.memory_space<vmem>>, vector<1x256xf32>
    %c0_6 = arith.constant 0 : index
    %c0_7 = arith.constant 0 : index
    %6 = vector.load %arg5[%c0_6, %c0_7] : memref<8x256xf32, #tpu.memory_space<vmem>>, vector<8x256xf32>
    %7 = arith.subf %3, %4 : vector<8x256xf32>
    %8 = math.absf %7 : vector<8x256xf32>
    %9 = vector.broadcast %5 : vector<1x256xf32> to vector<8x256xf32>
    %10 = arith.mulf %8, %9 : vector<8x256xf32>
    %11 = arith.addf %6, %10 : vector<8x256xf32>
    %c0_8 = arith.constant 0 : index
    %c0_9 = arith.constant 0 : index
    %12 = vector.load %arg5[%c0_8, %c0_9] : memref<8x256xf32, #tpu.memory_space<vmem>>, vector<8x256xf32>
    tpu.vector_store %arg5[%c0_8, %c0_9], %11 {strides = array<i32>} : memref<8x256xf32, #tpu.memory_space<vmem>>, vector<8x256xf32>,
    %c0_i32_10 = arith.constant 0 : i32
    %13 = arith.cmpi eq, %arg0, %c0_i32_10 : i32
    %14 = arith.extui %13 : i1 to i32
    %c0_i32_11 = arith.constant 0 : i32
    %15 = arith.cmpi ne, %14, %c0_i32_11 : i32
    scf.if %15 {
      %c0_12 = arith.constant 0 : index
      %c0_13 = arith.constant 0 : index
      %16 = vector.load %arg5[%c0_12, %c0_13] : memref<8x256xf32, #tpu.memory_space<vmem>>, vector<8x256xf32>
      %17 = vector.shape_cast %16 : vector<8x256xf32> to vector<1x8x256xf32>
      %cst = arith.constant dense<0.000000e+00> : vector<1xf32>
      %18 = vector.multi_reduction <add>, %17, %cst [1, 2] : vector<1x8x256xf32> to vector<1xf32>
      %19 = vector.shape_cast %18 : vector<1xf32> to vector<1x1x1xf32>
      %20 = vector.extract %19[0, 0, 0] : f32 from vector<1x1x1xf32>
      %c0_14 = arith.constant 0 : index
      %21 = memref.load %arg4[%c0_14] : memref<1xf32, #tpu.memory_space<smem>>
      memref.store %20, %arg4[%c0_14] : memref<1xf32, #tpu.memory_space<smem>>
    } else {
    }
    return
  }
  func.func @transform_0(%arg0: i32) -> (i32, i32) {
    %c0_i32 = arith.constant 0 : i32
    %c0_i32_0 = arith.constant 0 : i32
    return %arg0, %c0_i32 : i32, i32
  }
  func.func @transform_1(%arg0: i32) -> (i32, i32) {
    %c0_i32 = arith.constant 0 : i32
    %c0_i32_0 = arith.constant 0 : i32
    return %arg0, %c0_i32 : i32, i32
  }
  func.func @transform_2(%arg0: i32) -> (i32, i32) {
    %c0_i32 = arith.constant 0 : i32
    %c0_i32_0 = arith.constant 0 : i32
    %c0_i32_1 = arith.constant 0 : i32
    return %c0_i32, %c0_i32_0 : i32, i32
  }
  func.func @transform_3(%arg0: i32) -> i32 {
    %c0_i32 = arith.constant 0 : i32
    %c0_i32_0 = arith.constant 0 : i32
    return %c0_i32 : i32
  }
}

</mosaic_0001>

<llo_original>
// kernel: tpu_custom_call.1
$region0: #{tpu_custom_call.1}
  #allocation0 [shape = 'u32[]', space=smem, size = 0x4, offset = 0x4, fixed_abs, tag = 'smem constant byte address 0x4 - core index']
  #allocation1 [shape = 'u32[144,128]{1,0:T(1,128)}', space=vmem, size = 0x12000, scoped, tag = 'internal scratch']
  #allocation2 [shape = 'f32[8,256]{1,0:T(8,128)}', space=vmem, size = 0x2000, scoped, tag = 'scratch operand']
  %s0 = inlined_call_operand.hbm [shape: f32[8,256], index: 0, kind: input, shape index: {}]
  %s1 = inlined_call_operand.hbm [shape: f32[8,256], index: 1, kind: input, shape index: {}]
  %s2 = inlined_call_operand.vmem [shape: f32[1,256], index: 2, kind: input, shape index: {}]
  %s3 = inlined_call_operand.hbm [shape: f32[1], index: 3, kind: output, shape index: {}]
  %s4 = sld [smem:[#allocation0]]
  $region38: #{tpu_custom_call.1} parent=0
    _
  %s6 = ssub.s32 1, %s4
  %s7 = scalar_select 0, %s6, %s4
  $region1: #{tpu_custom_call.1} parent=0
    #allocation3 [shape = 'u8[8192]{0}', space=vmem, size = 0x2000, scoped, tag = 'input window, operand 0, single buffered']
    #allocation4 [shape = 's32[1]{0}', space=sflag, size = 0x4, scoped, tag = 'scoped memory for tpu_custom_call.1']
    #allocation5 [shape = 's32[1]{0}', space=sflag, size = 0x4, scoped, tag = 'scoped memory for tpu_custom_call.1']
    #allocation6 [shape = 'u8[8192]{0}', space=vmem, size = 0x2000, scoped, tag = 'input window, operand 1, single buffered']
    #allocation7 [shape = 's32[1]{0}', space=sflag, size = 0x4, scoped, tag = 'scoped memory for tpu_custom_call.1']
    #allocation8 [shape = 'u8[512]{0}', space=smem, size = 0x200, scoped, tag = 'output window, operand 0, single buffered']
    %8 = vsyncpa [#allocation4], 0
    %9 = vsyncpa [#allocation7], 0
    %10 = vsyncpa [#allocation5], 0
    // Predicated region
    $region2: #{tpu_custom_call.1} parent=1 // pred_check
      _
    $region3: #{tpu_custom_call.1} parent=1 // pred_check_branch
      %12 = sbr.rel (0) target = $region5
    $region4: #{tpu_custom_call.1} parent=1 // pred_region
      %s14 = ssub.s32 256, 256
      %15 = vsyncadd [#allocation4], %s14
      %s17 = sshll.u32 [#allocation3], 4
      %s18 = int_to_ptr.vmem [resolvable:$true] %s17
      %20 = dma.hbm_to_vmem [thread:$0]  %s0, 256, %s18, [#allocation4]
    $region5: #{tpu_custom_call.1} parent=1 // pred_fallthru
      _
    // Predicated region
    $region6: #{tpu_custom_call.1} parent=1 // pred_check
      _
    $region7: #{tpu_custom_call.1} parent=1 // pred_check_branch
      %22 = sbr.rel (0) target = $region9
    $region8: #{tpu_custom_call.1} parent=1 // pred_region
      %s24 = ssub.s32 256, 256
      %25 = vsyncadd [#allocation7], %s24
      %s27 = sshll.u32 [#allocation6], 4
      %s28 = int_to_ptr.vmem [resolvable:$true] %s27
      %30 = dma.hbm_to_vmem [thread:$0]  %s1, 256, %s28, [#allocation7]
    $region9: #{tpu_custom_call.1} parent=1 // pred_fallthru
      _
    // Predicated region
    $region10: #{tpu_custom_call.1} parent=1 // pred_check
      _
    $region11: #{tpu_custom_call.1} parent=1 // pred_check_branch
      %32 = sbr.rel (0) target = $region13
    $region12: #{tpu_custom_call.1} parent=1 // pred_region
      _
    $region13: #{tpu_custom_call.1} parent=1 // pred_fallthru
      _
    // Predicated region
    $region14: #{tpu_custom_call.1} parent=1 // pred_check
      _
    $region15: #{tpu_custom_call.1} parent=1 // pred_check_branch
      %34 = sbr.rel (0) target = $region17
    $region16: #{tpu_custom_call.1} parent=1 // pred_region
      %35 = dma.done [#allocation4], 256
    $region17: #{tpu_custom_call.1} parent=1 // pred_fallthru
      _
    // Predicated region
    $region18: #{tpu_custom_call.1} parent=1 // pred_check
      _
    $region19: #{tpu_custom_call.1} parent=1 // pred_check_branch
      %37 = sbr.rel (0) target = $region21
    $region20: #{tpu_custom_call.1} parent=1 // pred_region
      %38 = dma.done [#allocation7], 256
    $region21: #{tpu_custom_call.1} parent=1 // pred_fallthru
      _
    %p39 = scmp.eq.s32.totalorder 0, 0
    // Predicated region
    $region22: #{tpu_custom_call.1} parent=1 // pred_check
      %p40 = pneg %p39
    $region23: #{tpu_custom_call.1} parent=1 // pred_check_branch
      %42 = sbr.rel (%p40) target = $region25
    $region24: #{tpu_custom_call.1} parent=1 // pred_region
      %43 = vst [vmem:[#allocation2] sm:$0xff] 0.0
      %44 = vst [vmem:[#allocation2 + $0x8] sm:$0xff] 0.0
      %s45 = scalar_lea.smem [#allocation8], 0
      %46 = sst [smem:[%s45]] 0.0
    $region25: #{tpu_custom_call.1} parent=1 // pred_fallthru
      _
    %v47 = vld [vmem:[#allocation3] sm:$0xff]
    %v48 = vld [vmem:[#allocation3 + $0x8] sm:$0xff]
    %v49 = vld [vmem:[#allocation6] sm:$0xff]
    %v50 = vld [vmem:[#allocation6 + $0x8] sm:$0xff]
    %v51 = vld [vmem:[%s2] sm:$0x3]
    %v52 = vld [vmem:[#allocation2] sm:$0xff]
    %v53 = vld [vmem:[#allocation2 + $0x8] sm:$0xff]
    %v54 = vsub.f32 %v47, %v49
    %v55 = vsub.f32 %v48, %v50
    %v56 = vand.u32 2147483647, %v54
    %v57 = vand.u32 2147483647, %v55
    %v59 = vlaneseq
    %v60 = vshrl.u32 %v59, 7
    %v61 = vsub.s32 0, %v60
    %v62 = vrot.slane %v51, %v61
    %v63 = vlaneseq
    %v64 = vshrl.u32 %v63, 7
    %v65 = vsub.s32 1, %v64
    %v66 = vrot.slane %v51, %v65
    %v69 = vmul.f32 %v56, %v62
    %v70 = vmul.f32 %v57, %v66
    %v71 = vadd.f32 %v52, %v69
    %v72 = vadd.f32 %v53, %v70
    %73 = vst [vmem:[#allocation2] sm:$0xff] %v71
    %74 = vst [vmem:[#allocation2 + $0x8] sm:$0xff] %v72
    // Predicated region
    $region26: #{tpu_custom_call.1} parent=1 // pred_check
      %p75 = pneg %p39
    $region27: #{tpu_custom_call.1} parent=1 // pred_check_branch
      %77 = sbr.rel (%p75) target = $region29
    $region28: #{tpu_custom_call.1} parent=1 // pred_region
      %v78 = vld [vmem:[#allocation2] sm:$0xff]
      %v79 = vld [vmem:[#allocation2 + $0x8] sm:$0xff]
      %v80 = vadd.f32 %v78, %v79
      %81 = vadd.xlane.f32.xlu0 %v80
      %v82 = vpop.xlane.xlu0 %81
      %v83 = vrot.slane %v82, 4
      %v84 = vadd.f32 %v82, %v83
      %v85 = vrot.slane %v84, 2
      %v86 = vadd.f32 %v84, %v85
      %v87 = vrot.slane %v86, 1
      %v88 = vadd.f32 %v86, %v87
      %s89 = vtos %v88
      %s90 = scalar_lea.smem [#allocation8], 0
      %91 = sst [smem:[%s90]] %s89
    $region29: #{tpu_custom_call.1} parent=1 // pred_fallthru
      _
    // Predicated region
    $region30: #{tpu_custom_call.1} parent=1 // pred_check
      _
    $region31: #{tpu_custom_call.1} parent=1 // pred_check_branch
      %93 = sbr.rel (0) target = $region33
    $region32: #{tpu_custom_call.1} parent=1 // pred_region
      %s95 = ssub.s32 16, 16
      %96 = vsyncadd [#allocation5], %s95
      %99 = dma.smem_to_hbm [#allocation8], 16, %s3, [#allocation5]
    $region33: #{tpu_custom_call.1} parent=1 // pred_fallthru
      _
    // Predicated region
    $region34: #{tpu_custom_call.1} parent=1 // pred_check
      _
    $region35: #{tpu_custom_call.1} parent=1 // pred_check_branch
      %101 = sbr.rel (0) target = $region37
    $region36: #{tpu_custom_call.1} parent=1 // pred_region
      %102 = dma.done [#allocation5], 16
    $region37: #{tpu_custom_call.1} parent=1 // pred_fallthru
      _
    %103 = sfence
    %104 = vsyncpa [#allocation4], 1
    %105 = vsyncpa [#allocation7], 1
    %106 = vsyncpa [#allocation5], 1

</llo_original>
